<compile_context>
chip_gen: v5e
topology: v5e:2x2
jax: 0.10.0
libtpu: 0.0.40
codegen_flags: <defaults>
</compile_context>

<pallas_src>
import functools

import jax
import jax.numpy as jnp
from jax.experimental import pallas as pl
from jax.experimental.pallas import tpu as pltpu


def _round_up(x, m):
    return (x + m - 1) // m * m


# ---------------------------------------------------------------------------
# Fused 2-layer GCN kernel.
#
# Grid = (phase, row_tile_i, k_tile)   -- all axes sequential ("arbitrary")
#   phase 0:  acc += A[i,k] @ XW1[k]  ;  at last k:  h = relu(acc + b1)
#                                                   tw[i] = h @ W2
#   phase 1:  acc += A[i,k] @ tw[k]   ;  at last k:  out[i] = acc + b2
#
# `a_resident` (static): A is a single resident (n_pad, n_pad) VMEM block
# (read from HBM once); tk == n_pad and n_k == 1 in that mode.
# ---------------------------------------------------------------------------
def _fused_gcn_kernel(a_ref, xw1_ref, b1_ref, w2_ref, b2_ref,   # inputs
                      o_ref,                                     # output
                      tw_ref, acc_ref,                           # scratch
                      *, t, tk, n_k, a_resident):
    p = pl.program_id(0)
    i = pl.program_id(1)
    k = pl.program_id(2)

    @pl.when(k == 0)
    def _():
        acc_ref[...] = jnp.zeros_like(acc_ref)

    col_k = pl.multiple_of(k * tk, tk)
    if a_resident:
        # A lives whole in VMEM; slice the current row band (lane dim full,
        # so no dynamic lane-offset slicing is needed).
        row_i = pl.multiple_of(i * t, t)
        a_tile = a_ref[pl.ds(row_i, t), :]          # (t, n_pad) bf16
    else:
        a_tile = a_ref[...]                         # (t, tk) bf16

    # ---- tiled aggregation: acc += A[i, k] @ SRC[k]
    @pl.when(p == 0)
    def _():
        acc_ref[...] += jnp.dot(
            a_tile, xw1_ref[pl.ds(col_k, tk), :],
            preferred_element_type=jnp.float32)

    @pl.when(p == 1)
    def _():
        acc_ref[...] += jnp.dot(
            a_tile, tw_ref[pl.ds(col_k, tk), :],
            preferred_element_type=jnp.float32)

    # ---- per-row-tile epilogues
    @pl.when((p == 0) & (k == n_k - 1))
    def _():
        row_i = pl.multiple_of(i * t, t)
        # H row band, quantized to bf16 (matches reference_forward_bf16),
        # then the layer-2 transform is fused right here so phase 1 only has
        # to aggregate (no inter-phase matmul bubble).
        h = jnp.maximum(acc_ref[...] + b1_ref[...], 0.0).astype(jnp.bfloat16)
        tw_ref[pl.ds(row_i, t), :] = jnp.dot(
            h, w2_ref[...],
            preferred_element_type=jnp.float32).astype(tw_ref.dtype)

    @pl.when((p == 1) & (k == n_k - 1))
    def _():
        o_ref[...] = (acc_ref[...] + b2_ref[...]).astype(o_ref.dtype)


# ---------------------------------------------------------------------------
# Glue: dense normalized adjacency, optionally built directly at padded size
# (padded rows/cols stay exactly zero).  Duplicate edges keep multiplicity;
# self loops are added only where missing (PyG add_remaining_self_loops).
# ---------------------------------------------------------------------------
def build_normalized_adjacency(edge_index, num_nodes, num_rows=None):
    num_rows = num_nodes if num_rows is None else num_rows
    src = edge_index[0]
    dst = edge_index[1]
    a = jnp.zeros((num_rows, num_rows), dtype=jnp.float32)
    a = a.at[dst, src].add(1.0)                    # out[dst] += msg from src
    node_ids = jnp.arange(num_nodes)
    has_self_loop = a[node_ids, node_ids] > 0
    a = a.at[node_ids, node_ids].add(jnp.where(has_self_loop, 0.0, 1.0))
    deg = jnp.sum(a, axis=1)
    d_inv_sqrt = jnp.where(deg > 0, jax.lax.rsqrt(deg), 0.0)
    return d_inv_sqrt[:, None] * a * d_inv_sqrt[None, :]


# ---------------------------------------------------------------------------
# Full module forward (single fused pallas_call)
# ---------------------------------------------------------------------------
def gnn_fraud_detector_forward(x, edge_index, params, *, block_rows=512):
    # block_rows=512 respects the v7x 64 MiB VMEM budget; 1024 is a reasonable
    # choice on v5e/v6e (128 MiB) for very large graphs.
    n, _ = x.shape
    hidden = params["w1"].shape[1]
    cout = params["w2"].shape[1]

    bf16 = jnp.bfloat16

    # ---- tile / padding choices -------------------------------------------
    t = min(block_rows, _round_up(n, 128))           # square-ish A tile
    n_pad = _round_up(n, t)
    f = _round_up(max(hidden, cout), 128)             # lane-padded feature dim
    n_tiles = n_pad // t

    # ---- A_hat built directly into the padded bf16 buffer ------------------
    a_p = build_normalized_adjacency(edge_index, n, n_pad).astype(bf16)

    # ---- XW1 precomputed outside the kernel (hoisted transform) ------------
    xw1 = jnp.dot(x.astype(bf16), params["w1"].astype(bf16),
                  preferred_element_type=jnp.float32).astype(bf16)
    xw1_p = jnp.zeros((n_pad, f), bf16).at[:n, :hidden].set(xw1)

    b1_p = jnp.zeros((1, f), jnp.float32).at[:, :hidden].set(
        params["b1"].reshape(1, hidden))
    w2_p = jnp.zeros((f, f), bf16).at[:hidden, :cout].set(
        params["w2"].astype(bf16))
    b2_p = jnp.zeros((1, f), jnp.float32).at[:, :cout].set(
        params["b2"].reshape(1, cout))

    # ---- A residency: read A from HBM once when it fits comfortably --------
    a_resident_budget = 24 << 20                      # bytes (double-buffered)
    a_resident = (2 * n_pad * n_pad * 2) <= a_resident_budget
    if a_resident:
        tk = n_pad
        a_spec = pl.BlockSpec((n_pad, n_pad), lambda p_, i, k: (0, 0))
    else:
        tk = t
        a_spec = pl.BlockSpec((t, t), lambda p_, i, k: (i, k))
    n_k = n_pad // tk
    grid = (2, n_tiles, n_k)                          # (phase, row tile, k)

    kernel = functools.partial(
        _fused_gcn_kernel, t=t, tk=tk, n_k=n_k, a_resident=a_resident)

    # ---- VMEM footprint -> scoped limit (leave headroom on v7x) ------------
    a_bytes = 2 * (n_pad * n_pad if a_resident else t * t) * 2
    vmem_est = (a_bytes
                + 2 * n_pad * f * 2        # XW1 (double-buffered)
                + 2 * f * f * 2            # W2
                + 2 * 2 * 8 * f * 4        # b1, b2 (sublane padded)
                + 2 * t * f * 4            # output block
                + n_pad * f * 2            # tw scratch
                + t * f * 4)               # accumulator scratch
    vmem_limit = int(1.4 * vmem_est) + (2 << 20)
    vmem_limit = max(vmem_limit, 16 << 20)
    vmem_limit = min(vmem_limit, 48 << 20)

    # ---- advisory cost estimate --------------------------------------------
    a_reads = 1 if a_resident else 2
    flops = (2 * 2 * n_pad * n_pad * f      # two A_hat aggregation passes
             + 2 * n_pad * f * f)           # fused H @ W2
    bytes_accessed = (a_reads * n_pad * n_pad * 2
                      + n_pad * f * 2 + f * f * 2 + 2 * f * 4
                      + n_pad * f * 4)

    out_p = pl.pallas_call(
        kernel,
        out_shape=jax.ShapeDtypeStruct((n_pad, f), jnp.float32),
        grid=grid,
        in_specs=[
            a_spec,                                                  # A_hat
            pl.BlockSpec((n_pad, f), lambda p_, i, k: (0, 0)),       # XW1
            pl.BlockSpec((1, f), lambda p_, i, k: (0, 0)),           # b1
            pl.BlockSpec((f, f), lambda p_, i, k: (0, 0)),           # W2
            pl.BlockSpec((1, f), lambda p_, i, k: (0, 0)),           # b2
        ],
        # Phase-aware map: during phase 0 the output block index is pinned to
        # (0, 0) so no garbage tiles are ever flushed; phase 1 writes tile i.
        out_specs=pl.BlockSpec((t, f), lambda p_, i, k: (i * p_, 0)),
        scratch_shapes=[
            pltpu.VMEM((n_pad, f), bf16),          # tw = H @ W2 (built phase 0)
            pltpu.VMEM((t, f), jnp.float32),       # f32 accumulator
        ],
        compiler_params=pltpu.CompilerParams(
            # Fused design keeps tw resident across phases -> sequential grid.
            dimension_semantics=("arbitrary", "arbitrary", "arbitrary"),
            vmem_limit_bytes=vmem_limit,
        ),
        cost_estimate=pl.CostEstimate(
            flops=flops, transcendentals=0, bytes_accessed=bytes_accessed),
    )(a_p, xw1_p, b1_p, w2_p, b2_p)

    return out_p[:n, :cout]


def init_params(key, in_channels, hidden_channels, out_channels=2):
    k1, k2 = jax.random.split(key)
    # GCNConv: glorot-uniform weights, zero bias.
    lim1 = jnp.sqrt(6.0 / (in_channels + hidden_channels))
    lim2 = jnp.sqrt(6.0 / (hidden_channels + out_channels))
    w1 = jax.random.uniform(
        k1, (in_channels, hidden_channels), jnp.float32, -lim1, lim1)
    w2 = jax.random.uniform(
        k2, (hidden_channels, out_channels), jnp.float32, -lim2, lim2)
    b1 = jnp.zeros((1, hidden_channels), jnp.float32)
    b2 = jnp.zeros((1, out_channels), jnp.float32)
    return {"w1": w1, "b1": b1, "w2": w2, "b2": b2}


# ---------------------------------------------------------------------------
# Pure-JAX references
# ---------------------------------------------------------------------------
def reference_forward(x, edge_index, params):
    a_hat = build_normalized_adjacency(edge_index, x.shape[0])
    h = jnp.maximum(a_hat @ (x @ params["w1"]) + params["b1"], 0.0)
    return a_hat @ (h @ params["w2"]) + params["b2"]


def reference_forward_bf16(x, edge_index, params):
    """Replicates the kernel's bf16-operand / f32-accumulate numerics."""
    def bq(v):
        return v.astype(jnp.bfloat16).astype(jnp.float32)

    a = bq(build_normalized_adjacency(edge_index, x.shape[0]))
    xb, w1, w2 = bq(x), bq(params["w1"]), bq(params["w2"])
    xw1 = bq(xb @ w1)
    h = bq(jnp.maximum(a @ xw1 + params["b1"], 0.0))
    hw2 = bq(h @ w2)
    return a @ hw2 + params["b2"]


if __name__ == "__main__":
    key = jax.random.PRNGKey(0)
    k_x, k_e, k_p = jax.random.split(key, 3)

    num_nodes = 16
    in_channels = 4
    hidden_channels = 32
    num_edges = 32

    x = jax.random.normal(k_x, (num_nodes, in_channels), dtype=jnp.float32)
    edge_index = jax.random.randint(
        k_e, (2, num_edges), 0, num_nodes, dtype=jnp.int32)

    params = init_params(k_p, in_channels, hidden_channels, out_channels=2)

    out = gnn_fraud_detector_forward(x, edge_index, params)
    out = jax.block_until_ready(out)
    assert out.shape == (num_nodes, 2)

    # Tight check against a reference that mimics the kernel's bf16 numerics.
    ref_q = reference_forward_bf16(x, edge_index, params)
    assert jnp.allclose(out, ref_q, atol=2e-3, rtol=2e-3), \
        "mismatch vs bf16-matched reference"

    # Loose sanity check against the full-f32 module forward.
    ref = reference_forward(x, edge_index, params)
    assert jnp.allclose(out, ref, atol=1e-1, rtol=1e-1), \
        "mismatch vs f32 reference"

    print("KERNEL_OK")
</pallas_src>

<mosaic_0001>
module attributes {stable_mosaic.version = 11 : i64} {
  func.func @_fused_gcn_kernel(%arg0: i32, %arg1: i32, %arg2: i32, %arg3: memref<128x128xbf16, #tpu.memory_space<vmem>>, %arg4: memref<128x128xbf16, #tpu.memory_space<vmem>>, %arg5: memref<1x128xf32, #tpu.memory_space<vmem>>, %arg6: memref<128x128xbf16, #tpu.memory_space<vmem>>, %arg7: memref<1x128xf32, #tpu.memory_space<vmem>>, %arg8: memref<128x128xf32, #tpu.memory_space<vmem>>, %arg9: memref<128x128xbf16, #tpu.memory_space<vmem>>, %arg10: memref<128x128xf32, #tpu.memory_space<vmem>>) attributes {dimension_semantics = [#tpu.dimension_semantics<arbitrary>, #tpu.dimension_semantics<arbitrary>, #tpu.dimension_semantics<arbitrary>], iteration_bounds = array<i64: 2, 1, 1>, scalar_prefetch = 0 : i64, scratch_operands = 2 : i64, tpu.core_type = #tpu.core_type<tc>, window_params = [{pipeline_mode = #tpu.pipeline_mode<synchronous>, transform_indices = @transform_0, window_bounds = array<i64: 128, 128>}, {pipeline_mode = #tpu.pipeline_mode<synchronous>, transform_indices = @transform_1, window_bounds = array<i64: 128, 128>}, {pipeline_mode = #tpu.pipeline_mode<synchronous>, transform_indices = @transform_2, window_bounds = array<i64: 1, 128>}, {pipeline_mode = #tpu.pipeline_mode<synchronous>, transform_indices = @transform_3, window_bounds = array<i64: 128, 128>}, {pipeline_mode = #tpu.pipeline_mode<synchronous>, transform_indices = @transform_4, window_bounds = array<i64: 1, 128>}, {transform_indices = @transform_5, window_bounds = array<i64: 128, 128>}]} {
    %c0_i32 = arith.constant 0 : i32
    %0 = arith.cmpi eq, %arg2, %c0_i32 : i32
    %1 = arith.extui %0 : i1 to i32
    %c0_i32_0 = arith.constant 0 : i32
    %2 = arith.cmpi ne, %1, %c0_i32_0 : i32
    scf.if %2 {
      %cst = arith.constant 0.000000e+00 : f32
      %25 = vector.broadcast %cst : f32 to vector<128x128xf32>
      %c0_11 = arith.constant 0 : index
      %c0_12 = arith.constant 0 : index
      %26 = vector.load %arg10[%c0_11, %c0_12] : memref<128x128xf32, #tpu.memory_space<vmem>>, vector<128x128xf32>
      tpu.vector_store %arg10[%c0_11, %c0_12], %25 {strides = array<i32>} : memref<128x128xf32, #tpu.memory_space<vmem>>, vector<128x128xf32>,
    } else {
    }
    %c128_i32 = arith.constant 128 : i32
    %3 = arith.muli %arg2, %c128_i32 : i32
    %4 = tpu.assume_multiple %3, 128 : i32
    %c128_i32_1 = arith.constant 128 : i32
    %5 = arith.muli %arg1, %c128_i32_1 : i32
    %6 = tpu.assume_multiple %5, 128 : i32
    %7 = arith.index_cast %6 : i32 to index
    %c0 = arith.constant 0 : index
    %8 = vector.load %arg3[%7, %c0] : memref<128x128xbf16, #tpu.memory_space<vmem>>, vector<128x128xbf16>
    %c0_i32_2 = arith.constant 0 : i32
    %9 = arith.cmpi eq, %arg0, %c0_i32_2 : i32
    %10 = arith.extui %9 : i1 to i32
    %c0_i32_3 = arith.constant 0 : i32
    %11 = arith.cmpi ne, %10, %c0_i32_3 : i32
    scf.if %11 {
      %c0_11 = arith.constant 0 : index
      %c0_12 = arith.constant 0 : index
      %25 = vector.load %arg10[%c0_11, %c0_12] : memref<128x128xf32, #tpu.memory_space<vmem>>, vector<128x128xf32>
      %26 = arith.index_cast %4 : i32 to index
      %c0_13 = arith.constant 0 : index
      %27 = vector.load %arg4[%26, %c0_13] : memref<128x128xbf16, #tpu.memory_space<vmem>>, vector<128x128xbf16>
      %cst = arith.constant dense<0.000000e+00> : vector<128x128xf32>
      %28 = tpu.matmul %8, %27, %cst {dimension_numbers = #tpu.dot_dimension_numbers<[1], [0], [0], [1], [0, 0, 1, 1], [], []>} : vector<128x128xbf16>, vector<128x128xbf16>, vector<128x128xf32> -> vector<128x128xf32>
      %29 = arith.addf %25, %28 : vector<128x128xf32>
      %c0_14 = arith.constant 0 : index
      %c0_15 = arith.constant 0 : index
      %30 = vector.load %arg10[%c0_14, %c0_15] : memref<128x128xf32, #tpu.memory_space<vmem>>, vector<128x128xf32>
      tpu.vector_store %arg10[%c0_14, %c0_15], %29 {strides = array<i32>} : memref<128x128xf32, #tpu.memory_space<vmem>>, vector<128x128xf32>,
    } else {
    }
    %c1_i32 = arith.constant 1 : i32
    %12 = arith.cmpi eq, %arg0, %c1_i32 : i32
    %13 = arith.extui %12 : i1 to i32
    %c0_i32_4 = arith.constant 0 : i32
    %14 = arith.cmpi ne, %13, %c0_i32_4 : i32
    scf.if %14 {
      %c0_11 = arith.constant 0 : index
      %c0_12 = arith.constant 0 : index
      %25 = vector.load %arg10[%c0_11, %c0_12] : memref<128x128xf32, #tpu.memory_space<vmem>>, vector<128x128xf32>
      %26 = arith.index_cast %4 : i32 to index
      %c0_13 = arith.constant 0 : index
      %27 = vector.load %arg9[%26, %c0_13] : memref<128x128xbf16, #tpu.memory_space<vmem>>, vector<128x128xbf16>
      %cst = arith.constant dense<0.000000e+00> : vector<128x128xf32>
      %28 = tpu.matmul %8, %27, %cst {dimension_numbers = #tpu.dot_dimension_numbers<[1], [0], [0], [1], [0, 0, 1, 1], [], []>} : vector<128x128xbf16>, vector<128x128xbf16>, vector<128x128xf32> -> vector<128x128xf32>
      %29 = arith.addf %25, %28 : vector<128x128xf32>
      %c0_14 = arith.constant 0 : index
      %c0_15 = arith.constant 0 : index
      %30 = vector.load %arg10[%c0_14, %c0_15] : memref<128x128xf32, #tpu.memory_space<vmem>>, vector<128x128xf32>
      tpu.vector_store %arg10[%c0_14, %c0_15], %29 {strides = array<i32>} : memref<128x128xf32, #tpu.memory_space<vmem>>, vector<128x128xf32>,
    } else {
    }
    %c0_i32_5 = arith.constant 0 : i32
    %15 = arith.cmpi eq, %arg0, %c0_i32_5 : i32
    %c0_i32_6 = arith.constant 0 : i32
    %16 = arith.cmpi eq, %arg2, %c0_i32_6 : i32
    %17 = arith.andi %15, %16 : i1
    %18 = arith.extui %17 : i1 to i32
    %c0_i32_7 = arith.constant 0 : i32
    %19 = arith.cmpi ne, %18, %c0_i32_7 : i32
    scf.if %19 {
      %c128_i32_11 = arith.constant 128 : i32
      %25 = arith.muli %arg1, %c128_i32_11 : i32
      %26 = tpu.assume_multiple %25, 128 : i32
      %c0_12 = arith.constant 0 : index
      %c0_13 = arith.constant 0 : index
      %27 = vector.load %arg10[%c0_12, %c0_13] : memref<128x128xf32, #tpu.memory_space<vmem>>, vector<128x128xf32>
      %c0_14 = arith.constant 0 : index
      %c0_15 = arith.constant 0 : index
      %28 = vector.load %arg5[%c0_14, %c0_15] : memref<1x128xf32, #tpu.memory_space<vmem>>, vector<1x128xf32>
      %29 = vector.broadcast %28 : vector<1x128xf32> to vector<128x128xf32>
      %30 = arith.addf %27, %29 : vector<128x128xf32>
      %cst = arith.constant 0.000000e+00 : f32
      %31 = vector.broadcast %cst : f32 to vector<128x128xf32>
      %32 = arith.maximumf %30, %31 : vector<128x128xf32>
      %33 = arith.truncf %32 : vector<128x128xf32> to vector<128x128xbf16>
      %c0_16 = arith.constant 0 : index
      %c0_17 = arith.constant 0 : index
      %34 = vector.load %arg6[%c0_16, %c0_17] : memref<128x128xbf16, #tpu.memory_space<vmem>>, vector<128x128xbf16>
      %cst_18 = arith.constant dense<0.000000e+00> : vector<128x128xf32>
      %35 = tpu.matmul %33, %34, %cst_18 {dimension_numbers = #tpu.dot_dimension_numbers<[1], [0], [0], [1], [0, 0, 1, 1], [], []>} : vector<128x128xbf16>, vector<128x128xbf16>, vector<128x128xf32> -> vector<128x128xf32>
      %36 = arith.truncf %35 : vector<128x128xf32> to vector<128x128xbf16>
      %37 = arith.index_cast %26 : i32 to index
      %c0_19 = arith.constant 0 : index
      %38 = vector.load %arg9[%37, %c0_19] : memref<128x128xbf16, #tpu.memory_space<vmem>>, vector<128x128xbf16>
      tpu.vector_store %arg9[%37, %c0_19], %36 {strides = array<i32>} : memref<128x128xbf16, #tpu.memory_space<vmem>>, vector<128x128xbf16>,
    } else {
    }
    %c1_i32_8 = arith.constant 1 : i32
    %20 = arith.cmpi eq, %arg0, %c1_i32_8 : i32
    %c0_i32_9 = arith.constant 0 : i32
    %21 = arith.cmpi eq, %arg2, %c0_i32_9 : i32
    %22 = arith.andi %20, %21 : i1
    %23 = arith.extui %22 : i1 to i32
    %c0_i32_10 = arith.constant 0 : i32
    %24 = arith.cmpi ne, %23, %c0_i32_10 : i32
    scf.if %24 {
      %c0_11 = arith.constant 0 : index
      %c0_12 = arith.constant 0 : index
      %25 = vector.load %arg10[%c0_11, %c0_12] : memref<128x128xf32, #tpu.memory_space<vmem>>, vector<128x128xf32>
      %c0_13 = arith.constant 0 : index
      %c0_14 = arith.constant 0 : index
      %26 = vector.load %arg7[%c0_13, %c0_14] : memref<1x128xf32, #tpu.memory_space<vmem>>, vector<1x128xf32>
      %27 = vector.broadcast %26 : vector<1x128xf32> to vector<128x128xf32>
      %28 = arith.addf %25, %27 : vector<128x128xf32>
      %c0_15 = arith.constant 0 : index
      %c0_16 = arith.constant 0 : index
      %29 = vector.load %arg8[%c0_15, %c0_16] : memref<128x128xf32, #tpu.memory_space<vmem>>, vector<128x128xf32>
      tpu.vector_store %arg8[%c0_15, %c0_16], %28 {strides = array<i32>} : memref<128x128xf32, #tpu.memory_space<vmem>>, vector<128x128xf32>,
    } else {
    }
    return
  }
  func.func @transform_0(%arg0: i32, %arg1: i32, %arg2: i32) -> (i32, i32) {
    %c0_i32 = arith.constant 0 : i32
    %c0_i32_0 = arith.constant 0 : i32
    %c0_i32_1 = arith.constant 0 : i32
    return %c0_i32, %c0_i32_0 : i32, i32
  }
  func.func @transform_1(%arg0: i32, %arg1: i32, %arg2: i32) -> (i32, i32) {
    %c0_i32 = arith.constant 0 : i32
    %c0_i32_0 = arith.constant 0 : i32
    %c0_i32_1 = arith.constant 0 : i32
    return %c0_i32, %c0_i32_0 : i32, i32
  }
  func.func @transform_2(%arg0: i32, %arg1: i32, %arg2: i32) -> (i32, i32) {
    %c0_i32 = arith.constant 0 : i32
    %c0_i32_0 = arith.constant 0 : i32
    %c0_i32_1 = arith.constant 0 : i32
    return %c0_i32, %c0_i32_0 : i32, i32
  }
  func.func @transform_3(%arg0: i32, %arg1: i32, %arg2: i32) -> (i32, i32) {
    %c0_i32 = arith.constant 0 : i32
    %c0_i32_0 = arith.constant 0 : i32
    %c0_i32_1 = arith.constant 0 : i32
    return %c0_i32, %c0_i32_0 : i32, i32
  }
  func.func @transform_4(%arg0: i32, %arg1: i32, %arg2: i32) -> (i32, i32) {
    %c0_i32 = arith.constant 0 : i32
    %c0_i32_0 = arith.constant 0 : i32
    %c0_i32_1 = arith.constant 0 : i32
    return %c0_i32, %c0_i32_0 : i32, i32
  }
  func.func @transform_5(%arg0: i32, %arg1: i32, %arg2: i32) -> (i32, i32) {
    %0 = arith.muli %arg1, %arg0 : i32
    %c0_i32 = arith.constant 0 : i32
    %c0_i32_0 = arith.constant 0 : i32
    return %0, %c0_i32 : i32, i32
  }
}

</mosaic_0001>

<llo_original>
// kernel: tpu_custom_call.1
$region0: #{tpu_custom_call.1}
  #allocation0 [shape = 'u32[]', space=smem, size = 0x4, offset = 0x4, fixed_abs, tag = 'smem constant byte address 0x4 - core index']
  #allocation1 [shape = 'u32[72,128]{1,0:T(1,128)}', space=vmem, size = 0x9000, scoped, tag = 'internal scratch']
  #allocation2 [shape = 'bf16[128,128]{1,0:T(8,128)(2,1)}', space=vmem, size = 0x8000, scoped, tag = 'scratch operand']
  #allocation3 [shape = 'f32[128,128]{1,0:T(8,128)}', space=vmem, size = 0x10000, scoped, tag = 'scratch operand']
  %s0 = inlined_call_operand.hbm [shape: bf16[128,128], index: 0, kind: input, shape index: {}]
  %s1 = inlined_call_operand.hbm [shape: bf16[128,128], index: 1, kind: input, shape index: {}]
  %s2 = inlined_call_operand.vmem [shape: f32[1,128], index: 2, kind: input, shape index: {}]
  %s3 = inlined_call_operand.hbm [shape: bf16[128,128], index: 3, kind: input, shape index: {}]
  %s4 = inlined_call_operand.vmem [shape: f32[1,128], index: 4, kind: input, shape index: {}]
  %s5 = inlined_call_operand.hbm [shape: f32[128,128], index: 5, kind: output, shape index: {}]
  %s6 = sld [smem:[#allocation0]]
  $region85: #{tpu_custom_call.1} parent=0
    _
  %s8 = ssub.s32 1, %s6
  %s9 = scalar_select 0, %s8, %s6
  $region1: #{tpu_custom_call.1} parent=0
    #allocation4 [shape = 'u8[32768]{0}', space=vmem, size = 0x8000, scoped, tag = 'input window, operand 0, single buffered']
    #allocation5 [shape = 's32[2]{0}', space=sflag, size = 0x8, scoped, tag = 'scoped memory for tpu_custom_call.1']
    #allocation6 [shape = 's32[2]{0}', space=sflag, size = 0x8, scoped, tag = 'scoped memory for tpu_custom_call.1']
    #allocation7 [shape = 'u8[32768]{0}', space=vmem, size = 0x8000, scoped, tag = 'input window, operand 1, single buffered']
    #allocation8 [shape = 's32[1]{0}', space=sflag, size = 0x4, scoped, tag = 'scoped memory for tpu_custom_call.1']
    #allocation9 [shape = 'u8[32768]{0}', space=vmem, size = 0x8000, scoped, tag = 'input window, operand 3, single buffered']
    #allocation10 [shape = 'u8[131072]{0}', space=vmem, size = 0x20000, scoped, tag = 'output window, operand 0']
    %10 = vsyncpa [#allocation5], 0
    %11 = vsyncpa [#allocation8], 0
    %12 = vsyncpa [#allocation6], 0
    %s13 = scalar_lea.sflag [#allocation6], 1
    %14 = vsyncpa %s13, 0
    loop: start=0, step=1, limit=4
    $region2: #{tpu_custom_call.1} parent=1 // loop_pre_header
      _
    $region3: #{tpu_custom_call.1} parent=1 // loop_header
      %s16 = sphi 0, %s20
      %p17 = scmp.ge.s32.totalorder %s16, 4
      %s23 = sphi 0, %s42
      %s24 = sphi 0, %s38
      %s25 = sphi 0, %s34
      %s26 = sphi 0, %s23
      %s27 = sphi 0, %s24
      %s28 = sphi 0, %s25
      %s29 = sphi 0, %s26
      %s30 = sphi 0, %s27
      %s31 = sphi 0, %s28
      %s43 = sphi 0, %s43
      %s45 = sphi 0, %s43
      %s46 = sphi 0, %s45
      %s60 = sphi 0, %s46
      %s64 = sphi 0, %s64
      %s66 = sphi 0, %s64
      %s67 = sphi 0, %s66
      %s81 = sphi 0, %s67
      %s85 = sphi 0, %s85
      %s87 = sphi 0, %s85
      %s88 = sphi 0, %s87
      %s102 = sphi 0, %s88
      %s106 = sphi 0, %s106
      %s108 = sphi 0, %s106
      %s109 = sphi 0, %s108
      %s123 = sphi 0, %s109
      %s127 = sphi 0, %s127
      %s129 = sphi 0, %s127
      %s130 = sphi 0, %s129
      %s144 = sphi 0, %s130
      %s152 = sphi 0, %s154
      %s155 = sphi 0, %s152
      %s156 = sphi 0, %s155
      %s172 = sphi 0, %s156
    $region4: #{tpu_custom_call.1} parent=1 // loop_header_branch
      %19 = sbr.rel (%p17) target = $region8
    $region5: #{tpu_custom_call.1} parent=1 // loop_body
      %s21 = ssub.s32 %s16, 1
      %s22 = ssub.s32 %s16, 2
      %s32 = sadd.s32 1, %s25
      %p33 = scmp.ge.s32.totalorder %s32, 1
      %s34 = scalar_select %p33, 0, %s32
      %s35 = sadd.s32 1, %s24
      %s36 = scalar_select %p33, %s35, %s24
      %p37 = scmp.ge.s32.totalorder %s36, 1
      %s38 = scalar_select %p37, 0, %s36
      %s39 = sadd.s32 1, %s23
      %s40 = scalar_select %p37, %s39, %s23
      %p41 = scmp.ge.s32.totalorder %s40, 2
      %s42 = scalar_select %p41, 0, %s40
      %s44 = sadd.s32 %s43, 1
      %p47 = scmp.eq.s32.totalorder %s16, 1
      %p48 = scmp.ne.s32.totalorder %s43, %s45
      %p49 = scmp.eq.s32.totalorder %s16, 0
      %p50 = por %p48, %p49
      %p51 = scmp.ne.s32.totalorder %s43, %s45
      %p52 = scmp.eq.s32.totalorder %s21, 1
      %p53 = por %p51, %p52
      %p54 = scmp.ne.s32.totalorder %s45, %s46
      %p55 = scmp.eq.s32.totalorder %s21, 0
      %p56 = por %p54, %p55
      %p57 = scmp.ne.s32.totalorder %s45, %s46
      %p58 = scmp.eq.s32.totalorder %s22, 1
      %p59 = por %p57, %p58
      %p61 = scmp.ne.s32.totalorder %s46, %s60
      %p62 = scmp.eq.s32.totalorder %s22, 0
      %p63 = por %p61, %p62
      %s65 = sadd.s32 %s64, 1
      %p68 = scmp.eq.s32.totalorder %s16, 1
      %p69 = scmp.ne.s32.totalorder %s64, %s66
      %p70 = scmp.eq.s32.totalorder %s16, 0
      %p71 = por %p69, %p70
      %p72 = scmp.ne.s32.totalorder %s64, %s66
      %p73 = scmp.eq.s32.totalorder %s21, 1
      %p74 = por %p72, %p73
      %p75 = scmp.ne.s32.totalorder %s66, %s67
      %p76 = scmp.eq.s32.totalorder %s21, 0
      %p77 = por %p75, %p76
      %p78 = scmp.ne.s32.totalorder %s66, %s67
      %p79 = scmp.eq.s32.totalorder %s22, 1
      %p80 = por %p78, %p79
      %p82 = scmp.ne.s32.totalorder %s67, %s81
      %p83 = scmp.eq.s32.totalorder %s22, 0
      %p84 = por %p82, %p83
      %s86 = sadd.s32 %s85, 1
      %p89 = scmp.eq.s32.totalorder %s16, 1
      %p90 = scmp.ne.s32.totalorder %s85, %s87
      %p91 = scmp.eq.s32.totalorder %s16, 0
      %p92 = por %p90, %p91
      %p93 = scmp.ne.s32.totalorder %s85, %s87
      %p94 = scmp.eq.s32.totalorder %s21, 1
      %p95 = por %p93, %p94
      %p96 = scmp.ne.s32.totalorder %s87, %s88
      %p97 = scmp.eq.s32.totalorder %s21, 0
      %p98 = por %p96, %p97
      %p99 = scmp.ne.s32.totalorder %s87, %s88
      %p100 = scmp.eq.s32.totalorder %s22, 1
      %p101 = por %p99, %p100
      %p103 = scmp.ne.s32.totalorder %s88, %s102
      %p104 = scmp.eq.s32.totalorder %s22, 0
      %p105 = por %p103, %p104
      %s107 = sadd.s32 %s106, 1
      %p110 = scmp.eq.s32.totalorder %s16, 1
      %p111 = scmp.ne.s32.totalorder %s106, %s108
      %p112 = scmp.eq.s32.totalorder %s16, 0
      %p113 = por %p111, %p112
      %p114 = scmp.ne.s32.totalorder %s106, %s108
      %p115 = scmp.eq.s32.totalorder %s21, 1
      %p116 = por %p114, %p115
      %p117 = scmp.ne.s32.totalorder %s108, %s109
      %p118 = scmp.eq.s32.totalorder %s21, 0
      %p119 = por %p117, %p118
      %p120 = scmp.ne.s32.totalorder %s108, %s109
      %p121 = scmp.eq.s32.totalorder %s22, 1
      %p122 = por %p120, %p121
      %p124 = scmp.ne.s32.totalorder %s109, %s123
      %p125 = scmp.eq.s32.totalorder %s22, 0
      %p126 = por %p124, %p125
      %s128 = sadd.s32 %s127, 1
      %p131 = scmp.eq.s32.totalorder %s16, 1
      %p132 = scmp.ne.s32.totalorder %s127, %s129
      %p133 = scmp.eq.s32.totalorder %s16, 0
      %p134 = por %p132, %p133
      %p135 = scmp.ne.s32.totalorder %s127, %s129
      %p136 = scmp.eq.s32.totalorder %s21, 1
      %p137 = por %p135, %p136
      %p138 = scmp.ne.s32.totalorder %s129, %s130
      %p139 = scmp.eq.s32.totalorder %s21, 0
      %p140 = por %p138, %p139
      %p141 = scmp.ne.s32.totalorder %s129, %s130
      %p142 = scmp.eq.s32.totalorder %s22, 1
      %p143 = por %p141, %p142
      %p145 = scmp.ne.s32.totalorder %s130, %s144
      %p146 = scmp.eq.s32.totalorder %s22, 0
      %p147 = por %p145, %p146
      %s148 = smul.u32 %s24, %s23
      %s149 = smul.u32 %s38, %s42
      %s150 = ssub.s32 %s148, %s149
      %p151 = scmp.eq.s32.totalorder %s150, 0
      %s153 = sadd.s32 %s152, 1
      %s154 = scalar_select %p151, %s152, %s153
      %p157 = pneg %p151
      %p158 = scmp.eq.s32.totalorder %s16, 1
      %p159 = por %p157, %p158
      %p160 = scmp.ne.s32.totalorder %s152, %s155
      %p161 = scmp.eq.s32.totalorder %s16, 0
      %p162 = por %p160, %p161
      %p163 = scmp.ne.s32.totalorder %s152, %s155
      %p164 = scmp.eq.s32.totalorder %s21, 1
      %p165 = por %p163, %p164
      %p166 = scmp.ne.s32.totalorder %s155, %s156
      %p167 = scmp.eq.s32.totalorder %s21, 0
      %p168 = por %p166, %p167
      %p169 = scmp.ne.s32.totalorder %s155, %s156
      %p170 = scmp.eq.s32.totalorder %s22, 1
      %p171 = por %p169, %p170
      %p173 = scmp.ne.s32.totalorder %s156, %s172
      %p174 = scmp.eq.s32.totalorder %s22, 0
      %p175 = por %p173, %p174
      %p176 = scmp.le.s32.totalorder 1, %s16
      %p177 = scmp.lt.s32.totalorder %s16, 3
      %p178 = pnand %p176, %p177
      %p179 = pneg %p178
      // Predicated region
      $region9: #{tpu_custom_call.1} parent=5 // pred_check
        _
      $region10: #{tpu_custom_call.1} parent=5 // pred_check_branch
        %181 = sbr.rel (%p178) target = $region12
      $region11: #{tpu_custom_call.1} parent=5 // pred_region
        %s182 = ssub.s32 %s16, 1
        // Predicated region
        $region13: #{tpu_custom_call.1} parent=11 // pred_check
          %p183 = pneg %p56
        $region14: #{tpu_custom_call.1} parent=11 // pred_check_branch
          %185 = sbr.rel (%p183) target = $region16
        $region15: #{tpu_custom_call.1} parent=11 // pred_region
          %187 = vsyncadd [#allocation5], 0
          %s188 = sshll.u32 %s0, 4
          %s189 = int_to_ptr.hbm [resolvable:$true] %s188
          %s190 = sshll.u32 [#allocation4], 4
          %s191 = int_to_ptr.vmem [resolvable:$true] %s190
          %196 = dma.hbm_to_vmem [thread:$0]  %s189, 1024, %s191, [#allocation5], 64, 64, 4
        $region16: #{tpu_custom_call.1} parent=11 // pred_fallthru
          _
        // Predicated region
        $region17: #{tpu_custom_call.1} parent=11 // pred_check
          %p197 = pneg %p77
        $region18: #{tpu_custom_call.1} parent=11 // pred_check_branch
          %199 = sbr.rel (%p197) target = $region20
        $region19: #{tpu_custom_call.1} parent=11 // pred_region
          %201 = vsyncadd [#allocation8], 0
          %s202 = sshll.u32 %s1, 4
          %s203 = int_to_ptr.hbm [resolvable:$true] %s202
          %s204 = sshll.u32 [#allocation7], 4
          %s205 = int_to_ptr.vmem [resolvable:$true] %s204
          %210 = dma.hbm_to_vmem [thread:$0]  %s203, 1024, %s205, [#allocation8], 64, 64, 4
        $region20: #{tpu_custom_call.1} parent=11 // pred_fallthru
          _
        // Predicated region
        $region21: #{tpu_custom_call.1} parent=11 // pred_check
          %p211 = pneg %p98
        $region22: #{tpu_custom_call.1} parent=11 // pred_check_branch
          %213 = sbr.rel (%p211) target = $region24
        $region23: #{tpu_custom_call.1} parent=11 // pred_region
          _
        $region24: #{tpu_custom_call.1} parent=11 // pred_fallthru
          _
        // Predicated region
        $region25: #{tpu_custom_call.1} parent=11 // pred_check
          %p214 = pneg %p119
        $region26: #{tpu_custom_call.1} parent=11 // pred_check_branch
          %216 = sbr.rel (%p214) target = $region28
        $region27: #{tpu_custom_call.1} parent=11 // pred_region
          %218 = vsyncadd [#allocation8], 0
          %s219 = sshll.u32 %s3, 4
          %s220 = int_to_ptr.hbm [resolvable:$true] %s219
          %s221 = sshll.u32 [#allocation9], 4
          %s222 = int_to_ptr.vmem [resolvable:$true] %s221
          %227 = dma.hbm_to_vmem [thread:$0]  %s220, 1024, %s222, [#allocation8], 64, 64, 4
        $region28: #{tpu_custom_call.1} parent=11 // pred_fallthru
          _
        // Predicated region
        $region29: #{tpu_custom_call.1} parent=11 // pred_check
          %p228 = pneg %p140
        $region30: #{tpu_custom_call.1} parent=11 // pred_check_branch
          %230 = sbr.rel (%p228) target = $region32
        $region31: #{tpu_custom_call.1} parent=11 // pred_region
          _
        $region32: #{tpu_custom_call.1} parent=11 // pred_fallthru
          _
      $region12: #{tpu_custom_call.1} parent=5 // pred_fallthru
        _
      %p231 = scmp.lt.s32.totalorder %s16, 2
      // Predicated region
      $region33: #{tpu_custom_call.1} parent=5 // pred_check
        %p232 = pneg %p231
      $region34: #{tpu_custom_call.1} parent=5 // pred_check_branch
        %234 = sbr.rel (%p232) target = $region36
      $region35: #{tpu_custom_call.1} parent=5 // pred_region
        _
      $region36: #{tpu_custom_call.1} parent=5 // pred_fallthru
        _
      %p235 = scmp.le.s32.totalorder 1, %s16
      %p236 = scmp.lt.s32.totalorder %s16, 3
      %p237 = pnand %p235, %p236
      %p238 = pneg %p237
      // Predicated region
      $region37: #{tpu_custom_call.1} parent=5 // pred_check
        _
      $region38: #{tpu_custom_call.1} parent=5 // pred_check_branch
        %240 = sbr.rel (%p237) target = $region40
      $region39: #{tpu_custom_call.1} parent=5 // pred_region
        %s241 = ssub.s32 %s16, 1
        // Predicated region
        $region41: #{tpu_custom_call.1} parent=39 // pred_check
          %p242 = pneg %p56
        $region42: #{tpu_custom_call.1} parent=39 // pred_check_branch
          %244 = sbr.rel (%p242) target = $region44
        $region43: #{tpu_custom_call.1} parent=39 // pred_region
          %246 = dma.done [#allocation5], 1024
        $region44: #{tpu_custom_call.1} parent=39 // pred_fallthru
          _
        // Predicated region
        $region45: #{tpu_custom_call.1} parent=39 // pred_check
          %p247 = pneg %p77
        $region46: #{tpu_custom_call.1} parent=39 // pred_check_branch
          %249 = sbr.rel (%p247) target = $region48
        $region47: #{tpu_custom_call.1} parent=39 // pred_region
          %251 = dma.done [#allocation8], 1024
        $region48: #{tpu_custom_call.1} parent=39 // pred_fallthru
          _
        // Predicated region
        $region49: #{tpu_custom_call.1} parent=39 // pred_check
          %p252 = pneg %p119
        $region50: #{tpu_custom_call.1} parent=39 // pred_check_branch
          %254 = sbr.rel (%p252) target = $region52
        $region51: #{tpu_custom_call.1} parent=39 // pred_region
          %256 = dma.done [#allocation8], 1024
        $region52: #{tpu_custom_call.1} parent=39 // pred_fallthru
          _
        %p257 = pneg %p56
        %p258 = pneg %p53
        %p259 = pneg %p77
        %p260 = pneg %p74
        %p261 = pneg %p98
        %p262 = pneg %p95
        %p263 = pneg %p119
        %p264 = pneg %p116
        %p265 = pneg %p140
        %p266 = pneg %p137
        %p267 = pneg %p168
        %p268 = pneg %p165
        %s269 = sand.u32 %s155, 1
        %s270 = scalar_lea.sflag [#allocation6], %s269
        %s271 = sand.u32 %s155, 1
        %s272 = smul.addr %s271, 128
        %s273 = scalar_lea.vmem [#allocation10], %s272
        %s274 = smul.u32 %s27, %s26
        %s275 = smul.u32 16, %s274
        %p276 = scmp.eq.s32.totalorder %s28, 0
        // Predicated region
        $region53: #{tpu_custom_call.1} parent=39 // pred_check
          %p277 = pneg %p276
        $region54: #{tpu_custom_call.1} parent=39 // pred_check_branch
          %279 = sbr.rel (%p277) target = $region56
        $region55: #{tpu_custom_call.1} parent=39 // pred_region
          %280 = vst [vmem:[#allocation3] sm:$0xff] 0.0
          %281 = vst [vmem:[#allocation3 + $0x8] sm:$0xff] 0.0
          %282 = vst [vmem:[#allocation3 + $0x10] sm:$0xff] 0.0
          %283 = vst [vmem:[#allocation3 + $0x18] sm:$0xff] 0.0
          %284 = vst [vmem:[#allocation3 + $0x20] sm:$0xff] 0.0
          %285 = vst [vmem:[#allocation3 + $0x28] sm:$0xff] 0.0
          %286 = vst [vmem:[#allocation3 + $0x30] sm:$0xff] 0.0
          %287 = vst [vmem:[#allocation3 + $0x38] sm:$0xff] 0.0
          %288 = vst [vmem:[#allocation3 + $0x40] sm:$0xff] 0.0
          %289 = vst [vmem:[#allocation3 + $0x48] sm:$0xff] 0.0
          %290 = vst [vmem:[#allocation3 + $0x50] sm:$0xff] 0.0
          %291 = vst [vmem:[#allocation3 + $0x58] sm:$0xff] 0.0
          %292 = vst [vmem:[#allocation3 + $0x60] sm:$0xff] 0.0
          %293 = vst [vmem:[#allocation3 + $0x68] sm:$0xff] 0.0
          %294 = vst [vmem:[#allocation3 + $0x70] sm:$0xff] 0.0
          %295 = vst [vmem:[#allocation3 + $0x78] sm:$0xff] 0.0
        $region56: #{tpu_custom_call.1} parent=39 // pred_fallthru
          _
        %s296 = smul.u32 %s28, 128
        %s297 = smul.u32 %s27, 128
        %s298 = sshra.s32 %s297, 3
        %s299 = sand.u32 %s297, 7
        %s300 = smul.addr %s298, 4
        %s301 = scalar_lea.vmem [#allocation4], %s300
        %v302 = vld [vmem:[%s301] sm:$0xf]
        %v303 = vld [vmem:[%s301 + $0x4] sm:$0xf]
        %v304 = vld [vmem:[%s301 + $0x8] sm:$0xf]
        %v305 = vld [vmem:[%s301 + $0xc] sm:$0xf]
        %v306 = vld [vmem:[%s301 + $0x10] sm:$0xf]
        %v307 = vld [vmem:[%s301 + $0x14] sm:$0xf]
        %v308 = vld [vmem:[%s301 + $0x18] sm:$0xf]
        %v309 = vld [vmem:[%s301 + $0x1c] sm:$0xf]
        %v310 = vld [vmem:[%s301 + $0x20] sm:$0xf]
        %v311 = vld [vmem:[%s301 + $0x24] sm:$0xf]
        %v312 = vld [vmem:[%s301 + $0x28] sm:$0xf]
        %v313 = vld [vmem:[%s301 + $0x2c] sm:$0xf]
        %v314 = vld [vmem:[%s301 + $0x30] sm:$0xf]
        %v315 = vld [vmem:[%s301 + $0x34] sm:$0xf]
        %v316 = vld [vmem:[%s301 + $0x38] sm:$0xf]
        %v317 = vld [vmem:[%s301 + $0x3c] sm:$0xf]
        %p318 = scmp.eq.s32.totalorder %s26, 0
        // Predicated region
        $region57: #{tpu_custom_call.1} parent=39 // pred_check
          %p319 = pneg %p318
        $region58: #{tpu_custom_call.1} parent=39 // pred_check_branch
          %321 = sbr.rel (%p319) target = $region60
        $region59: #{tpu_custom_call.1} parent=39 // pred_region
          %v322 = vld [vmem:[#allocation3] sm:$0xff]
          %v323 = vld [vmem:[#allocation3 + $0x8] sm:$0xff]
          %v324 = vld [vmem:[#allocation3 + $0x10] sm:$0xff]
          %v325 = vld [vmem:[#allocation3 + $0x18] sm:$0xff]
          %v326 = vld [vmem:[#allocation3 + $0x20] sm:$0xff]
          %v327 = vld [vmem:[#allocation3 + $0x28] sm:$0xff]
          %v328 = vld [vmem:[#allocation3 + $0x30] sm:$0xff]
          %v329 = vld [vmem:[#allocation3 + $0x38] sm:$0xff]
          %v330 = vld [vmem:[#allocation3 + $0x40] sm:$0xff]
          %v331 = vld [vmem:[#allocation3 + $0x48] sm:$0xff]
          %v332 = vld [vmem:[#allocation3 + $0x50] sm:$0xff]
          %v333 = vld [vmem:[#allocation3 + $0x58] sm:$0xff]
          %v334 = vld [vmem:[#allocation3 + $0x60] sm:$0xff]
          %v335 = vld [vmem:[#allocation3 + $0x68] sm:$0xff]
          %v336 = vld [vmem:[#allocation3 + $0x70] sm:$0xff]
          %v337 = vld [vmem:[#allocation3 + $0x78] sm:$0xff]
          %s338 = sshra.s32 %s296, 3
          %s339 = sand.u32 %s296, 7
          %s340 = smul.addr %s338, 4
          %s341 = scalar_lea.vmem [#allocation7], %s340
          %v342 = vld [vmem:[%s341] sm:$0xf]
          %v343 = vld [vmem:[%s341 + $0x4] sm:$0xf]
          %v344 = vld [vmem:[%s341 + $0x8] sm:$0xf]
          %v345 = vld [vmem:[%s341 + $0xc] sm:$0xf]
          %v346 = vld [vmem:[%s341 + $0x10] sm:$0xf]
          %v347 = vld [vmem:[%s341 + $0x14] sm:$0xf]
          %v348 = vld [vmem:[%s341 + $0x18] sm:$0xf]
          %v349 = vld [vmem:[%s341 + $0x1c] sm:$0xf]
          %v350 = vld [vmem:[%s341 + $0x20] sm:$0xf]
          %v351 = vld [vmem:[%s341 + $0x24] sm:$0xf]
          %v352 = vld [vmem:[%s341 + $0x28] sm:$0xf]
          %v353 = vld [vmem:[%s341 + $0x2c] sm:$0xf]
          %v354 = vld [vmem:[%s341 + $0x30] sm:$0xf]
          %v355 = vld [vmem:[%s341 + $0x34] sm:$0xf]
          %v356 = vld [vmem:[%s341 + $0x38] sm:$0xf]
          %v357 = vld [vmem:[%s341 + $0x3c] sm:$0xf]
          %v374 = vunpack.c.l.b16 %v302
          %v375 = vunpack.c.l.b16 %v303
          %v376 = vunpack.c.l.b16 %v304
          %v377 = vunpack.c.l.b16 %v305
          %v378 = vunpack.c.l.b16 %v306
          %v379 = vunpack.c.l.b16 %v307
          %v380 = vunpack.c.l.b16 %v308
          %v381 = vunpack.c.l.b16 %v309
          %v382 = vunpack.c.l.b16 %v310
          %v383 = vunpack.c.l.b16 %v311
          %v384 = vunpack.c.l.b16 %v312
          %v385 = vunpack.c.l.b16 %v313
          %v386 = vunpack.c.l.b16 %v314
          %v387 = vunpack.c.l.b16 %v315
          %v388 = vunpack.c.l.b16 %v316
          %v389 = vunpack.c.l.b16 %v317
          %v390 = vpack.c.b16 %v375, %v374
          %v391 = vpack.c.b16 %v377, %v376
          %v392 = vpack.c.b16 %v379, %v378
          %v393 = vpack.c.b16 %v381, %v380
          %v394 = vpack.c.b16 %v383, %v382
          %v395 = vpack.c.b16 %v385, %v384
          %v396 = vpack.c.b16 %v387, %v386
          %v397 = vpack.c.b16 %v389, %v388
          %v422 = vunpack.c.l.b16 %v342
          %v423 = vunpack.c.l.b16 %v343
          %v424 = vunpack.c.l.b16 %v344
          %v425 = vunpack.c.l.b16 %v345
          %v426 = vunpack.c.l.b16 %v346
          %v427 = vunpack.c.l.b16 %v347
          %v428 = vunpack.c.l.b16 %v348
          %v429 = vunpack.c.l.b16 %v349
          %v430 = vunpack.c.l.b16 %v350
          %v431 = vunpack.c.l.b16 %v351
          %v432 = vunpack.c.l.b16 %v352
          %v433 = vunpack.c.l.b16 %v353
          %v434 = vunpack.c.l.b16 %v354
          %v435 = vunpack.c.l.b16 %v355
          %v436 = vunpack.c.l.b16 %v356
          %v437 = vunpack.c.l.b16 %v357
          %v438 = vpack.c.b16 %v423, %v422
          %v439 = vpack.c.b16 %v425, %v424
          %v440 = vpack.c.b16 %v427, %v426
          %v441 = vpack.c.b16 %v429, %v428
          %v442 = vpack.c.b16 %v431, %v430
          %v443 = vpack.c.b16 %v433, %v432
          %v444 = vpack.c.b16 %v435, %v434
          %v445 = vpack.c.b16 %v437, %v436
          %454 = vmatpush.bf16.msra.mxu0 %v445
          %455 = vmatpush.bf16.msra.mxu0 %v444
          %456 = vmatpush.bf16.msra.mxu0 %v443
          %457 = vmatpush.bf16.msra.mxu0 %v442
          %458 = vmatpush.bf16.msra.mxu0 %v441
          %459 = vmatpush.bf16.msra.mxu0 %v440
          %460 = vmatpush.bf16.msra.mxu0 %v439
          %461 = vmatpush.bf16.msra.mxu0 %v438
          %462 = vmatmul.bf16.gmra.mxu0 %v390
          %v463 = vpop.f32.mrf.mxu0
          %v464 = vadd.f32 0.0, %v463
          %v465 = vpop.f32.mrf.mxu0
          %v466 = vadd.f32 0.0, %v465
          %467 = vmatmul.bf16.gmra.mxu0 %v391
          %v468 = vpop.f32.mrf.mxu0
          %v469 = vadd.f32 0.0, %v468
          %v470 = vpop.f32.mrf.mxu0
          %v471 = vadd.f32 0.0, %v470
          %472 = vmatmul.bf16.gmra.mxu0 %v392
          %v473 = vpop.f32.mrf.mxu0
          %v474 = vadd.f32 0.0, %v473
          %v475 = vpop.f32.mrf.mxu0
          %v476 = vadd.f32 0.0, %v475
          %477 = vmatmul.bf16.gmra.mxu0 %v393
          %v478 = vpop.f32.mrf.mxu0
          %v479 = vadd.f32 0.0, %v478
          %v480 = vpop.f32.mrf.mxu0
          %v481 = vadd.f32 0.0, %v480
          %482 = vmatmul.bf16.gmra.mxu0 %v394
          %v483 = vpop.f32.mrf.mxu0
          %v484 = vadd.f32 0.0, %v483
          %v485 = vpop.f32.mrf.mxu0
          %v486 = vadd.f32 0.0, %v485
          %487 = vmatmul.bf16.gmra.mxu0 %v395
          %v488 = vpop.f32.mrf.mxu0
          %v489 = vadd.f32 0.0, %v488
          %v490 = vpop.f32.mrf.mxu0
          %v491 = vadd.f32 0.0, %v490
          %492 = vmatmul.bf16.gmra.mxu0 %v396
          %v493 = vpop.f32.mrf.mxu0
          %v494 = vadd.f32 0.0, %v493
          %v495 = vpop.f32.mrf.mxu0
          %v496 = vadd.f32 0.0, %v495
          %497 = vmatmul.bf16.gmra.mxu0 %v397
          %v498 = vpop.f32.mrf.mxu0
          %v499 = vadd.f32 0.0, %v498
          %v500 = vpop.f32.mrf.mxu0
          %v501 = vadd.f32 0.0, %v500
          %502 = vdwg.mxu0
          %v503 = vadd.f32 %v322, %v464
          %v504 = vadd.f32 %v323, %v466
          %v505 = vadd.f32 %v324, %v469
          %v506 = vadd.f32 %v325, %v471
          %v507 = vadd.f32 %v326, %v474
          %v508 = vadd.f32 %v327, %v476
          %v509 = vadd.f32 %v328, %v479
          %v510 = vadd.f32 %v329, %v481
          %v511 = vadd.f32 %v330, %v484
          %v512 = vadd.f32 %v331, %v486
          %v513 = vadd.f32 %v332, %v489
          %v514 = vadd.f32 %v333, %v491
          %v515 = vadd.f32 %v334, %v494
          %v516 = vadd.f32 %v335, %v496
          %v517 = vadd.f32 %v336, %v499
          %v518 = vadd.f32 %v337, %v501
          %519 = vst [vmem:[#allocation3] sm:$0xff] %v503
          %520 = vst [vmem:[#allocation3 + $0x8] sm:$0xff] %v504
          %521 = vst [vmem:[#allocation3 + $0x10] sm:$0xff] %v505
          %522 = vst [vmem:[#allocation3 + $0x18] sm:$0xff] %v506
          %523 = vst [vmem:[#allocation3 + $0x20] sm:$0xff] %v507
          %524 = vst [vmem:[#allocation3 + $0x28] sm:$0xff] %v508
          %525 = vst [vmem:[#allocation3 + $0x30] sm:$0xff] %v509
          %526 = vst [vmem:[#allocation3 + $0x38] sm:$0xff] %v510
          %527 = vst [vmem:[#allocation3 + $0x40] sm:$0xff] %v511
          %528 = vst [vmem:[#allocation3 + $0x48] sm:$0xff] %v512
          %529 = vst [vmem:[#allocation3 + $0x50] sm:$0xff] %v513
          %530 = vst [vmem:[#allocation3 + $0x58] sm:$0xff] %v514
          %531 = vst [vmem:[#allocation3 + $0x60] sm:$0xff] %v515
          %532 = vst [vmem:[#allocation3 + $0x68] sm:$0xff] %v516
          %533 = vst [vmem:[#allocation3 + $0x70] sm:$0xff] %v517
          %534 = vst [vmem:[#allocation3 + $0x78] sm:$0xff] %v518
        $region60: #{tpu_custom_call.1} parent=39 // pred_fallthru
          _
        %p535 = scmp.eq.s32.totalorder %s26, 1
        // Predicated region
        $region61: #{tpu_custom_call.1} parent=39 // pred_check
          %p536 = pneg %p535
        $region62: #{tpu_custom_call.1} parent=39 // pred_check_branch
          %538 = sbr.rel (%p536) target = $region64
        $region63: #{tpu_custom_call.1} parent=39 // pred_region
          %v539 = vld [vmem:[#allocation3] sm:$0xff]
          %v540 = vld [vmem:[#allocation3 + $0x8] sm:$0xff]
          %v541 = vld [vmem:[#allocation3 + $0x10] sm:$0xff]
          %v542 = vld [vmem:[#allocation3 + $0x18] sm:$0xff]
          %v543 = vld [vmem:[#allocation3 + $0x20] sm:$0xff]
          %v544 = vld [vmem:[#allocation3 + $0x28] sm:$0xff]
          %v545 = vld [vmem:[#allocation3 + $0x30] sm:$0xff]
          %v546 = vld [vmem:[#allocation3 + $0x38] sm:$0xff]
          %v547 = vld [vmem:[#allocation3 + $0x40] sm:$0xff]
          %v548 = vld [vmem:[#allocation3 + $0x48] sm:$0xff]
          %v549 = vld [vmem:[#allocation3 + $0x50] sm:$0xff]
          %v550 = vld [vmem:[#allocation3 + $0x58] sm:$0xff]
          %v551 = vld [vmem:[#allocation3 + $0x60] sm:$0xff]
          %v552 = vld [vmem:[#allocation3 + $0x68] sm:$0xff]
          %v553 = vld [vmem:[#allocation3 + $0x70] sm:$0xff]
          %v554 = vld [vmem:[#allocation3 + $0x78] sm:$0xff]
          %s555 = sshra.s32 %s296, 3
          %s556 = sand.u32 %s296, 7
          %s557 = smul.addr %s555, 4
          %s558 = scalar_lea.vmem [#allocation2], %s557
          %v559 = vld [vmem:[%s558] sm:$0xf]
          %v560 = vld [vmem:[%s558 + $0x4] sm:$0xf]
          %v561 = vld [vmem:[%s558 + $0x8] sm:$0xf]
          %v562 = vld [vmem:[%s558 + $0xc] sm:$0xf]
          %v563 = vld [vmem:[%s558 + $0x10] sm:$0xf]
          %v564 = vld [vmem:[%s558 + $0x14] sm:$0xf]
          %v565 = vld [vmem:[%s558 + $0x18] sm:$0xf]
          %v566 = vld [vmem:[%s558 + $0x1c] sm:$0xf]
          %v567 = vld [vmem:[%s558 + $0x20] sm:$0xf]
          %v568 = vld [vmem:[%s558 + $0x24] sm:$0xf]
          %v569 = vld [vmem:[%s558 + $0x28] sm:$0xf]
          %v570 = vld [vmem:[%s558 + $0x2c] sm:$0xf]
          %v571 = vld [vmem:[%s558 + $0x30] sm:$0xf]
          %v572 = vld [vmem:[%s558 + $0x34] sm:$0xf]
          %v573 = vld [vmem:[%s558 + $0x38] sm:$0xf]
          %v574 = vld [vmem:[%s558 + $0x3c] sm:$0xf]
          %v591 = vunpack.c.l.b16 %v302
          %v592 = vunpack.c.l.b16 %v303
          %v593 = vunpack.c.l.b16 %v304
          %v594 = vunpack.c.l.b16 %v305
          %v595 = vunpack.c.l.b16 %v306
          %v596 = vunpack.c.l.b16 %v307
          %v597 = vunpack.c.l.b16 %v308
          %v598 = vunpack.c.l.b16 %v309
          %v599 = vunpack.c.l.b16 %v310
          %v600 = vunpack.c.l.b16 %v311
          %v601 = vunpack.c.l.b16 %v312
          %v602 = vunpack.c.l.b16 %v313
          %v603 = vunpack.c.l.b16 %v314
          %v604 = vunpack.c.l.b16 %v315
          %v605 = vunpack.c.l.b16 %v316
          %v606 = vunpack.c.l.b16 %v317
          %v607 = vpack.c.b16 %v592, %v591
          %v608 = vpack.c.b16 %v594, %v593
          %v609 = vpack.c.b16 %v596, %v595
          %v610 = vpack.c.b16 %v598, %v597
          %v611 = vpack.c.b16 %v600, %v599
          %v612 = vpack.c.b16 %v602, %v601
          %v613 = vpack.c.b16 %v604, %v603
          %v614 = vpack.c.b16 %v606, %v605
          %v639 = vunpack.c.l.b16 %v559
          %v640 = vunpack.c.l.b16 %v560
          %v641 = vunpack.c.l.b16 %v561
          %v642 = vunpack.c.l.b16 %v562
          %v643 = vunpack.c.l.b16 %v563
          %v644 = vunpack.c.l.b16 %v564
          %v645 = vunpack.c.l.b16 %v565
          %v646 = vunpack.c.l.b16 %v566
          %v647 = vunpack.c.l.b16 %v567
          %v648 = vunpack.c.l.b16 %v568
          %v649 = vunpack.c.l.b16 %v569
          %v650 = vunpack.c.l.b16 %v570
          %v651 = vunpack.c.l.b16 %v571
          %v652 = vunpack.c.l.b16 %v572
          %v653 = vunpack.c.l.b16 %v573
          %v654 = vunpack.c.l.b16 %v574
          %v655 = vpack.c.b16 %v640, %v639
          %v656 = vpack.c.b16 %v642, %v641
          %v657 = vpack.c.b16 %v644, %v643
          %v658 = vpack.c.b16 %v646, %v645
          %v659 = vpack.c.b16 %v648, %v647
          %v660 = vpack.c.b16 %v650, %v649
          %v661 = vpack.c.b16 %v652, %v651
          %v662 = vpack.c.b16 %v654, %v653
          %671 = vmatpush.bf16.msra.mxu0 %v662
          %672 = vmatpush.bf16.msra.mxu0 %v661
          %673 = vmatpush.bf16.msra.mxu0 %v660
          %674 = vmatpush.bf16.msra.mxu0 %v659
          %675 = vmatpush.bf16.msra.mxu0 %v658
          %676 = vmatpush.bf16.msra.mxu0 %v657
          %677 = vmatpush.bf16.msra.mxu0 %v656
          %678 = vmatpush.bf16.msra.mxu0 %v655
          %679 = vmatmul.bf16.gmra.mxu0 %v607
          %v680 = vpop.f32.mrf.mxu0
          %v681 = vadd.f32 0.0, %v680
          %v682 = vpop.f32.mrf.mxu0
          %v683 = vadd.f32 0.0, %v682
          %684 = vmatmul.bf16.gmra.mxu0 %v608
          %v685 = vpop.f32.mrf.mxu0
          %v686 = vadd.f32 0.0, %v685
          %v687 = vpop.f32.mrf.mxu0
          %v688 = vadd.f32 0.0, %v687
          %689 = vmatmul.bf16.gmra.mxu0 %v609
          %v690 = vpop.f32.mrf.mxu0
          %v691 = vadd.f32 0.0, %v690
          %v692 = vpop.f32.mrf.mxu0
          %v693 = vadd.f32 0.0, %v692
          %694 = vmatmul.bf16.gmra.mxu0 %v610
          %v695 = vpop.f32.mrf.mxu0
          %v696 = vadd.f32 0.0, %v695
          %v697 = vpop.f32.mrf.mxu0
          %v698 = vadd.f32 0.0, %v697
          %699 = vmatmul.bf16.gmra.mxu0 %v611
          %v700 = vpop.f32.mrf.mxu0
          %v701 = vadd.f32 0.0, %v700
          %v702 = vpop.f32.mrf.mxu0
          %v703 = vadd.f32 0.0, %v702
          %704 = vmatmul.bf16.gmra.mxu0 %v612
          %v705 = vpop.f32.mrf.mxu0
          %v706 = vadd.f32 0.0, %v705
          %v707 = vpop.f32.mrf.mxu0
          %v708 = vadd.f32 0.0, %v707
          %709 = vmatmul.bf16.gmra.mxu0 %v613
          %v710 = vpop.f32.mrf.mxu0
          %v711 = vadd.f32 0.0, %v710
          %v712 = vpop.f32.mrf.mxu0
          %v713 = vadd.f32 0.0, %v712
          %714 = vmatmul.bf16.gmra.mxu0 %v614
          %v715 = vpop.f32.mrf.mxu0
          %v716 = vadd.f32 0.0, %v715
          %v717 = vpop.f32.mrf.mxu0
          %v718 = vadd.f32 0.0, %v717
          %719 = vdwg.mxu0
          %v720 = vadd.f32 %v539, %v681
          %v721 = vadd.f32 %v540, %v683
          %v722 = vadd.f32 %v541, %v686
          %v723 = vadd.f32 %v542, %v688
          %v724 = vadd.f32 %v543, %v691
          %v725 = vadd.f32 %v544, %v693
          %v726 = vadd.f32 %v545, %v696
          %v727 = vadd.f32 %v546, %v698
          %v728 = vadd.f32 %v547, %v701
          %v729 = vadd.f32 %v548, %v703
          %v730 = vadd.f32 %v549, %v706
          %v731 = vadd.f32 %v550, %v708
          %v732 = vadd.f32 %v551, %v711
          %v733 = vadd.f32 %v552, %v713
          %v734 = vadd.f32 %v553, %v716
          %v735 = vadd.f32 %v554, %v718
          %736 = vst [vmem:[#allocation3] sm:$0xff] %v720
          %737 = vst [vmem:[#allocation3 + $0x8] sm:$0xff] %v721
          %738 = vst [vmem:[#allocation3 + $0x10] sm:$0xff] %v722
          %739 = vst [vmem:[#allocation3 + $0x18] sm:$0xff] %v723
          %740 = vst [vmem:[#allocation3 + $0x20] sm:$0xff] %v724
          %741 = vst [vmem:[#allocation3 + $0x28] sm:$0xff] %v725
          %742 = vst [vmem:[#allocation3 + $0x30] sm:$0xff] %v726
          %743 = vst [vmem:[#allocation3 + $0x38] sm:$0xff] %v727
          %744 = vst [vmem:[#allocation3 + $0x40] sm:$0xff] %v728
          %745 = vst [vmem:[#allocation3 + $0x48] sm:$0xff] %v729
          %746 = vst [vmem:[#allocation3 + $0x50] sm:$0xff] %v730
          %747 = vst [vmem:[#allocation3 + $0x58] sm:$0xff] %v731
          %748 = vst [vmem:[#allocation3 + $0x60] sm:$0xff] %v732
          %749 = vst [vmem:[#allocation3 + $0x68] sm:$0xff] %v733
          %750 = vst [vmem:[#allocation3 + $0x70] sm:$0xff] %v734
          %751 = vst [vmem:[#allocation3 + $0x78] sm:$0xff] %v735
        $region64: #{tpu_custom_call.1} parent=39 // pred_fallthru
          _
        %p752 = pnand %p318, %p276
        %p753 = pneg %p752
        // Predicated region
        $region65: #{tpu_custom_call.1} parent=39 // pred_check
          _
        $region66: #{tpu_custom_call.1} parent=39 // pred_check_branch
          %755 = sbr.rel (%p752) target = $region68
        $region67: #{tpu_custom_call.1} parent=39 // pred_region
          %v756 = vld [vmem:[#allocation3] sm:$0xff]
          %v757 = vld [vmem:[#allocation3 + $0x8] sm:$0xff]
          %v758 = vld [vmem:[#allocation3 + $0x10] sm:$0xff]
          %v759 = vld [vmem:[#allocation3 + $0x18] sm:$0xff]
          %v760 = vld [vmem:[#allocation3 + $0x20] sm:$0xff]
          %v761 = vld [vmem:[#allocation3 + $0x28] sm:$0xff]
          %v762 = vld [vmem:[#allocation3 + $0x30] sm:$0xff]
          %v763 = vld [vmem:[#allocation3 + $0x38] sm:$0xff]
          %v764 = vld [vmem:[#allocation3 + $0x40] sm:$0xff]
          %v765 = vld [vmem:[#allocation3 + $0x48] sm:$0xff]
          %v766 = vld [vmem:[#allocation3 + $0x50] sm:$0xff]
          %v767 = vld [vmem:[#allocation3 + $0x58] sm:$0xff]
          %v768 = vld [vmem:[#allocation3 + $0x60] sm:$0xff]
          %v769 = vld [vmem:[#allocation3 + $0x68] sm:$0xff]
          %v770 = vld [vmem:[#allocation3 + $0x70] sm:$0xff]
          %v771 = vld [vmem:[#allocation3 + $0x78] sm:$0xff]
          %v772 = vld [vmem:[%s2] sm:$0x1]
          %v774 = vperm.slane %v772, 0
          %v776 = vadd.f32 %v756, %v774
          %v777 = vadd.f32 %v757, %v774
          %v778 = vadd.f32 %v758, %v774
          %v779 = vadd.f32 %v759, %v774
          %v780 = vadd.f32 %v760, %v774
          %v781 = vadd.f32 %v761, %v774
          %v782 = vadd.f32 %v762, %v774
          %v783 = vadd.f32 %v763, %v774
          %v784 = vadd.f32 %v764, %v774
          %v785 = vadd.f32 %v765, %v774
          %v786 = vadd.f32 %v766, %v774
          %v787 = vadd.f32 %v767, %v774
          %v788 = vadd.f32 %v768, %v774
          %v789 = vadd.f32 %v769, %v774
          %v790 = vadd.f32 %v770, %v774
          %v791 = vadd.f32 %v771, %v774
          %v792 = vmax.f32 %v776, 0.0
          %v793 = vmax.f32 %v777, 0.0
          %v794 = vmax.f32 %v778, 0.0
          %v795 = vmax.f32 %v779, 0.0
          %v796 = vmax.f32 %v780, 0.0
          %v797 = vmax.f32 %v781, 0.0
          %v798 = vmax.f32 %v782, 0.0
          %v799 = vmax.f32 %v783, 0.0
          %v800 = vmax.f32 %v784, 0.0
          %v801 = vmax.f32 %v785, 0.0
          %v802 = vmax.f32 %v786, 0.0
          %v803 = vmax.f32 %v787, 0.0
          %v804 = vmax.f32 %v788, 0.0
          %v805 = vmax.f32 %v789, 0.0
          %v806 = vmax.f32 %v790, 0.0
          %v807 = vmax.f32 %v791, 0.0
          %v808 = vpack.c.bf16 %v793, %v792
          %v809 = vpack.c.bf16 %v795, %v794
          %v810 = vpack.c.bf16 %v797, %v796
          %v811 = vpack.c.bf16 %v799, %v798
          %v812 = vpack.c.bf16 %v801, %v800
          %v813 = vpack.c.bf16 %v803, %v802
          %v814 = vpack.c.bf16 %v805, %v804
          %v815 = vpack.c.bf16 %v807, %v806
          %v816 = vld [vmem:[#allocation9] sm:$0xf]
          %v817 = vld [vmem:[#allocation9 + $0x4] sm:$0xf]
          %v818 = vld [vmem:[#allocation9 + $0x8] sm:$0xf]
          %v819 = vld [vmem:[#allocation9 + $0xc] sm:$0xf]
          %v820 = vld [vmem:[#allocation9 + $0x10] sm:$0xf]
          %v821 = vld [vmem:[#allocation9 + $0x14] sm:$0xf]
          %v822 = vld [vmem:[#allocation9 + $0x18] sm:$0xf]
          %v823 = vld [vmem:[#allocation9 + $0x1c] sm:$0xf]
          %v824 = vld [vmem:[#allocation9 + $0x20] sm:$0xf]
          %v825 = vld [vmem:[#allocation9 + $0x24] sm:$0xf]
          %v826 = vld [vmem:[#allocation9 + $0x28] sm:$0xf]
          %v827 = vld [vmem:[#allocation9 + $0x2c] sm:$0xf]
          %v828 = vld [vmem:[#allocation9 + $0x30] sm:$0xf]
          %v829 = vld [vmem:[#allocation9 + $0x34] sm:$0xf]
          %v830 = vld [vmem:[#allocation9 + $0x38] sm:$0xf]
          %v831 = vld [vmem:[#allocation9 + $0x3c] sm:$0xf]
          %v848 = vunpack.c.l.b16 %v816
          %v849 = vunpack.c.l.b16 %v817
          %v850 = vunpack.c.l.b16 %v818
          %v851 = vunpack.c.l.b16 %v819
          %v852 = vunpack.c.l.b16 %v820
          %v853 = vunpack.c.l.b16 %v821
          %v854 = vunpack.c.l.b16 %v822
          %v855 = vunpack.c.l.b16 %v823
          %v856 = vunpack.c.l.b16 %v824
          %v857 = vunpack.c.l.b16 %v825
          %v858 = vunpack.c.l.b16 %v826
          %v859 = vunpack.c.l.b16 %v827
          %v860 = vunpack.c.l.b16 %v828
          %v861 = vunpack.c.l.b16 %v829
          %v862 = vunpack.c.l.b16 %v830
          %v863 = vunpack.c.l.b16 %v831
          %v864 = vpack.c.b16 %v849, %v848
          %v865 = vpack.c.b16 %v851, %v850
          %v866 = vpack.c.b16 %v853, %v852
          %v867 = vpack.c.b16 %v855, %v854
          %v868 = vpack.c.b16 %v857, %v856
          %v869 = vpack.c.b16 %v859, %v858
          %v870 = vpack.c.b16 %v861, %v860
          %v871 = vpack.c.b16 %v863, %v862
          %880 = vmatpush.bf16.msra.mxu0 %v871
          %881 = vmatpush.bf16.msra.mxu0 %v870
          %882 = vmatpush.bf16.msra.mxu0 %v869
          %883 = vmatpush.bf16.msra.mxu0 %v868
          %884 = vmatpush.bf16.msra.mxu0 %v867
          %885 = vmatpush.bf16.msra.mxu0 %v866
          %886 = vmatpush.bf16.msra.mxu0 %v865
          %887 = vmatpush.bf16.msra.mxu0 %v864
          %888 = vmatmul.bf16.gmra.mxu0 %v808
          %v889 = vpop.f32.mrf.mxu0
          %v890 = vadd.f32 0.0, %v889
          %v891 = vpop.f32.mrf.mxu0
          %v892 = vadd.f32 0.0, %v891
          %893 = vmatmul.bf16.gmra.mxu0 %v809
          %v894 = vpop.f32.mrf.mxu0
          %v895 = vadd.f32 0.0, %v894
          %v896 = vpop.f32.mrf.mxu0
          %v897 = vadd.f32 0.0, %v896
          %898 = vmatmul.bf16.gmra.mxu0 %v810
          %v899 = vpop.f32.mrf.mxu0
          %v900 = vadd.f32 0.0, %v899
          %v901 = vpop.f32.mrf.mxu0
          %v902 = vadd.f32 0.0, %v901
          %903 = vmatmul.bf16.gmra.mxu0 %v811
          %v904 = vpop.f32.mrf.mxu0
          %v905 = vadd.f32 0.0, %v904
          %v906 = vpop.f32.mrf.mxu0
          %v907 = vadd.f32 0.0, %v906
          %908 = vmatmul.bf16.gmra.mxu0 %v812
          %v909 = vpop.f32.mrf.mxu0
          %v910 = vadd.f32 0.0, %v909
          %v911 = vpop.f32.mrf.mxu0
          %v912 = vadd.f32 0.0, %v911
          %913 = vmatmul.bf16.gmra.mxu0 %v813
          %v914 = vpop.f32.mrf.mxu0
          %v915 = vadd.f32 0.0, %v914
          %v916 = vpop.f32.mrf.mxu0
          %v917 = vadd.f32 0.0, %v916
          %918 = vmatmul.bf16.gmra.mxu0 %v814
          %v919 = vpop.f32.mrf.mxu0
          %v920 = vadd.f32 0.0, %v919
          %v921 = vpop.f32.mrf.mxu0
          %v922 = vadd.f32 0.0, %v921
          %923 = vmatmul.bf16.gmra.mxu0 %v815
          %v924 = vpop.f32.mrf.mxu0
          %v925 = vadd.f32 0.0, %v924
          %v926 = vpop.f32.mrf.mxu0
          %v927 = vadd.f32 0.0, %v926
          %928 = vdwg.mxu0
          %v929 = vpack.c.bf16 %v890, %v890
          %v930 = vpack.c.bf16 %v892, %v892
          %v931 = vpack.c.bf16 %v895, %v895
          %v932 = vpack.c.bf16 %v897, %v897
          %v933 = vpack.c.bf16 %v900, %v900
          %v934 = vpack.c.bf16 %v902, %v902
          %v935 = vpack.c.bf16 %v905, %v905
          %v936 = vpack.c.bf16 %v907, %v907
          %v937 = vpack.c.bf16 %v910, %v910
          %v938 = vpack.c.bf16 %v912, %v912
          %v939 = vpack.c.bf16 %v915, %v915
          %v940 = vpack.c.bf16 %v917, %v917
          %v941 = vpack.c.bf16 %v920, %v920
          %v942 = vpack.c.bf16 %v922, %v922
          %v943 = vpack.c.bf16 %v925, %v925
          %v944 = vpack.c.bf16 %v927, %v927
          %s945 = smul.addr %s298, 4
          %s946 = scalar_lea.vmem [#allocation2], %s945
          %947 = vst [vmem:[%s946] sm:$0xf] %v929
          %948 = vst [vmem:[%s946 + $0x4] sm:$0xf] %v930
          %949 = vst [vmem:[%s946 + $0x8] sm:$0xf] %v931
          %950 = vst [vmem:[%s946 + $0xc] sm:$0xf] %v932
          %951 = vst [vmem:[%s946 + $0x10] sm:$0xf] %v933
          %952 = vst [vmem:[%s946 + $0x14] sm:$0xf] %v934
          %953 = vst [vmem:[%s946 + $0x18] sm:$0xf] %v935
          %954 = vst [vmem:[%s946 + $0x1c] sm:$0xf] %v936
          %955 = vst [vmem:[%s946 + $0x20] sm:$0xf] %v937
          %956 = vst [vmem:[%s946 + $0x24] sm:$0xf] %v938
          %957 = vst [vmem:[%s946 + $0x28] sm:$0xf] %v939
          %958 = vst [vmem:[%s946 + $0x2c] sm:$0xf] %v940
          %959 = vst [vmem:[%s946 + $0x30] sm:$0xf] %v941
          %960 = vst [vmem:[%s946 + $0x34] sm:$0xf] %v942
          %961 = vst [vmem:[%s946 + $0x38] sm:$0xf] %v943
          %962 = vst [vmem:[%s946 + $0x3c] sm:$0xf] %v944
        $region68: #{tpu_custom_call.1} parent=39 // pred_fallthru
          _
        %p963 = pnand %p535, %p276
        %p964 = pneg %p963
        // Predicated region
        $region69: #{tpu_custom_call.1} parent=39 // pred_check
          _
        $region70: #{tpu_custom_call.1} parent=39 // pred_check_branch
          %966 = sbr.rel (%p963) target = $region72
        $region71: #{tpu_custom_call.1} parent=39 // pred_region
          %v967 = vld [vmem:[#allocation3] sm:$0xff]
          %v968 = vld [vmem:[#allocation3 + $0x8] sm:$0xff]
          %v969 = vld [vmem:[#allocation3 + $0x10] sm:$0xff]
          %v970 = vld [vmem:[#allocation3 + $0x18] sm:$0xff]
          %v971 = vld [vmem:[#allocation3 + $0x20] sm:$0xff]
          %v972 = vld [vmem:[#allocation3 + $0x28] sm:$0xff]
          %v973 = vld [vmem:[#allocation3 + $0x30] sm:$0xff]
          %v974 = vld [vmem:[#allocation3 + $0x38] sm:$0xff]
          %v975 = vld [vmem:[#allocation3 + $0x40] sm:$0xff]
          %v976 = vld [vmem:[#allocation3 + $0x48] sm:$0xff]
          %v977 = vld [vmem:[#allocation3 + $0x50] sm:$0xff]
          %v978 = vld [vmem:[#allocation3 + $0x58] sm:$0xff]
          %v979 = vld [vmem:[#allocation3 + $0x60] sm:$0xff]
          %v980 = vld [vmem:[#allocation3 + $0x68] sm:$0xff]
          %v981 = vld [vmem:[#allocation3 + $0x70] sm:$0xff]
          %v982 = vld [vmem:[#allocation3 + $0x78] sm:$0xff]
          %v983 = vld [vmem:[%s4] sm:$0x1]
          %v985 = vperm.slane %v983, 0
          %v987 = vadd.f32 %v967, %v985
          %v988 = vadd.f32 %v968, %v985
          %v989 = vadd.f32 %v969, %v985
          %v990 = vadd.f32 %v970, %v985
          %v991 = vadd.f32 %v971, %v985
          %v992 = vadd.f32 %v972, %v985
          %v993 = vadd.f32 %v973, %v985
          %v994 = vadd.f32 %v974, %v985
          %v995 = vadd.f32 %v975, %v985
          %v996 = vadd.f32 %v976, %v985
          %v997 = vadd.f32 %v977, %v985
          %v998 = vadd.f32 %v978, %v985
          %v999 = vadd.f32 %v979, %v985
          %v1000 = vadd.f32 %v980, %v985
          %v1001 = vadd.f32 %v981, %v985
          %v1002 = vadd.f32 %v982, %v985
          %1003 = vst [vmem:[%s273] sm:$0xff] %v987
          %1004 = vst [vmem:[%s273 + $0x8] sm:$0xff] %v988
          %1005 = vst [vmem:[%s273 + $0x10] sm:$0xff] %v989
          %1006 = vst [vmem:[%s273 + $0x18] sm:$0xff] %v990
          %1007 = vst [vmem:[%s273 + $0x20] sm:$0xff] %v991
          %1008 = vst [vmem:[%s273 + $0x28] sm:$0xff] %v992
          %1009 = vst [vmem:[%s273 + $0x30] sm:$0xff] %v993
          %1010 = vst [vmem:[%s273 + $0x38] sm:$0xff] %v994
          %1011 = vst [vmem:[%s273 + $0x40] sm:$0xff] %v995
          %1012 = vst [vmem:[%s273 + $0x48] sm:$0xff] %v996
          %1013 = vst [vmem:[%s273 + $0x50] sm:$0xff] %v997
          %1014 = vst [vmem:[%s273 + $0x58] sm:$0xff] %v998
          %1015 = vst [vmem:[%s273 + $0x60] sm:$0xff] %v999
          %1016 = vst [vmem:[%s273 + $0x68] sm:$0xff] %v1000
          %1017 = vst [vmem:[%s273 + $0x70] sm:$0xff] %v1001
          %1018 = vst [vmem:[%s273 + $0x78] sm:$0xff] %v1002
        $region72: #{tpu_custom_call.1} parent=39 // pred_fallthru
          _
        %s1019 = sand.u32 %s155, 1
        %s1020 = scalar_lea.sflag [#allocation6], %s1019
        %s1021 = sand.u32 %s155, 1
        %s1022 = smul.addr %s1021, 128
        %s1023 = scalar_lea.vmem [#allocation10], %s1022
        // Predicated region
        $region73: #{tpu_custom_call.1} parent=39 // pred_check
          %p1024 = pneg %p165
        $region74: #{tpu_custom_call.1} parent=39 // pred_check_branch
          %1026 = sbr.rel (%p1024) target = $region76
        $region75: #{tpu_custom_call.1} parent=39 // pred_region
          %s1027 = smul.u32 %s27, %s26
          %s1028 = smul.u32 16, %s1027
          %1030 = vsyncadd %s1020, 0
          %s1031 = smul.addr %s1028, 8
          %s1032 = scalar_lea.hbm %s5, %s1031
          %s1033 = sshll.u32 %s1023, 4
          %s1034 = int_to_ptr.vmem [resolvable:$true] %s1033
          %s1035 = sshll.u32 %s1032, 4
          %s1036 = int_to_ptr.hbm [resolvable:$true] %s1035
          %1041 = dma.vmem_to_hbm [thread:$0]  %s1034, 2048, %s1036, %s1020, 128, 128, 8
        $region76: #{tpu_custom_call.1} parent=39 // pred_fallthru
          _
      $region40: #{tpu_custom_call.1} parent=5 // pred_fallthru
        _
      %p1042 = scmp.le.s32.totalorder 2, %s16
      // Predicated region
      $region77: #{tpu_custom_call.1} parent=5 // pred_check
        %p1043 = pneg %p1042
      $region78: #{tpu_custom_call.1} parent=5 // pred_check_branch
        %1045 = sbr.rel (%p1043) target = $region80
      $region79: #{tpu_custom_call.1} parent=5 // pred_region
        %s1046 = ssub.s32 %s16, 2
        // Predicated region
        $region81: #{tpu_custom_call.1} parent=79 // pred_check
          %p1047 = pneg %p171
        $region82: #{tpu_custom_call.1} parent=79 // pred_check_branch
          %1049 = sbr.rel (%p1047) target = $region84
        $region83: #{tpu_custom_call.1} parent=79 // pred_region
          %s1050 = sand.u32 %s156, 1
          %s1051 = scalar_lea.sflag [#allocation6], %s1050
          %s1052 = sand.u32 %s156, 1
          %s1053 = smul.addr %s1052, 128
          %s1054 = scalar_lea.vmem [#allocation10], %s1053
          %1056 = dma.done %s1051, 2048
        $region84: #{tpu_custom_call.1} parent=79 // pred_fallthru
          _
      $region80: #{tpu_custom_call.1} parent=5 // pred_fallthru
        _
    $region6: #{tpu_custom_call.1} parent=1 // loop_footer
      %s20 = sadd.s32 1, %s16
    $region7: #{tpu_custom_call.1} parent=1 // loop_footer_branch
      %15 = sbr.rel target = $region3
    $region8: #{tpu_custom_call.1} parent=1 // loop_exit
      _
    %1057 = vsyncpa [#allocation5], 1
    %s1058 = scalar_lea.sflag [#allocation5], 1
    %1059 = vsyncpa %s1058, 1
    %1060 = vsyncpa [#allocation8], 1
    %1061 = vsyncpa [#allocation6], 1
    %s1062 = scalar_lea.sflag [#allocation6], 1
    %1063 = vsyncpa %s1062, 1

</llo_original>
